<compile_context>
chip_gen: v7x
topology: tpu7x:2x2x1
jax: 0.10.0
libtpu: 0.0.40
codegen_flags: <defaults>
</compile_context>

<pallas_src>
import jax
import jax.numpy as jnp
from jax import lax
from jax.experimental import pallas as pl
from jax.experimental.pallas import tpu as pltpu


def _round_up(x, m):
    return ((x + m - 1) // m) * m


def _pick_tile(n, cap=512):
    for t in (512, 256, 128):
        if t <= cap and n % t == 0:
            return t
    return 128


# --------------------------------------------------------------------------
# Pass 1: dinv = rsqrt(rowsum(A) + 1)     (the +1 folds in the self loop / I)
# Accumulates directly in the resident (TM, 1) output block across k tiles.
# --------------------------------------------------------------------------
def degree_kernel(a_ref, dinv_ref):
    k = pl.program_id(1)

    @pl.when(k == 0)
    def _():
        dinv_ref[...] = jnp.zeros_like(dinv_ref)

    dinv_ref[...] += jnp.sum(a_ref[...].astype(jnp.float32), axis=1,
                             keepdims=True)

    @pl.when(k == pl.num_programs(1) - 1)
    def _():
        dinv_ref[...] = lax.rsqrt(dinv_ref[...] + 1.0)


# --------------------------------------------------------------------------
# Pass 0 (project-first path only): H = X @ W, f32 output, accumulate in the
# resident output block over the F_in contraction tiles.
# --------------------------------------------------------------------------
def xw_kernel(x_ref, w_ref, o_ref):
    @pl.when(pl.program_id(1) == 0)
    def _():
        o_ref[...] = jnp.zeros_like(o_ref)

    o_ref[...] += jnp.dot(x_ref[...], w_ref[...],
                          preferred_element_type=jnp.float32)


# --------------------------------------------------------------------------
# Aggregate-first main pass:
#   out = (drow * (A @ (dcol*X) + drow*X_row)) @ W + b
# Accumulator width (F_in) differs from output width (F_out) -> VMEM scratch.
# --------------------------------------------------------------------------
def gcn_agg_project_kernel(a_ref, xk_ref, xi_ref, dcol_ref, drow_ref, w_ref,
                           b_ref, o_ref, acc_ref):
    k = pl.program_id(1)

    @pl.when(k == 0)
    def _():
        acc_ref[...] = jnp.zeros_like(acc_ref)

    xs = dcol_ref[...] * xk_ref[...].astype(jnp.float32)       # (TK, F_in_p)
    acc_ref[...] += jnp.dot(a_ref[...], xs.astype(a_ref.dtype),
                            preferred_element_type=jnp.float32)

    @pl.when(k == pl.num_programs(1) - 1)
    def _():
        drow = drow_ref[...]                                     # (TM, 1) f32
        h = drow * (acc_ref[...] + drow * xi_ref[...].astype(jnp.float32))
        out = jnp.dot(h.astype(w_ref.dtype), w_ref[...],
                      preferred_element_type=jnp.float32) + b_ref[...]
        o_ref[...] = out.astype(o_ref.dtype)


# --------------------------------------------------------------------------
# Project-first main pass (H = X @ W already computed):
#   out = drow * (A @ (dcol*H) + drow*H_row) + b
# Accumulator width == output width -> accumulate in the output block.
# --------------------------------------------------------------------------
def gcn_agg_kernel(a_ref, hk_ref, hi_ref, dcol_ref, drow_ref, b_ref, o_ref):
    k = pl.program_id(1)

    @pl.when(k == 0)
    def _():
        o_ref[...] = jnp.zeros_like(o_ref)

    hs = dcol_ref[...] * hk_ref[...]                             # (TK, F_out_p)
    o_ref[...] += jnp.dot(a_ref[...], hs.astype(a_ref.dtype),
                          preferred_element_type=jnp.float32)

    @pl.when(k == pl.num_programs(1) - 1)
    def _():
        drow = drow_ref[...]
        o_ref[...] = drow * (o_ref[...] + drow * hi_ref[...]) + b_ref[...]


# --------------------------------------------------------------------------
# Wrapper: pad to lane-dense shapes, pick tiles, run passes, slice back.
# --------------------------------------------------------------------------
@jax.jit
def gcn_layer(A, X, W, b):
    """A: (N,N), X: (N,F_in), W: (F_in,F_out), b: (F_out,) -> (N,F_out)."""
    N = A.shape[0]
    F_in = X.shape[1]
    F_out = W.shape[1]

    # Lane-dense padding (multiples of 128 on every lane axis).
    N_pad = _round_up(N, 128)
    F_in_p = _round_up(F_in, 128)
    F_out_p = _round_up(F_out, 128)

    # Tile sizes (well under scoped VMEM even double-buffered).
    TM = _pick_tile(N_pad, cap=256)     # output row tile
    TK = _pick_tile(N_pad, cap=512)     # contraction tile over nodes

    # Zero padding keeps rowsums / matmuls exact; padded rows get deg = 1.
    Ap = jnp.zeros((N_pad, N_pad), A.dtype).at[:N, :N].set(A)
    Xp = jnp.zeros((N_pad, F_in_p), X.dtype).at[:N, :F_in].set(X)
    Wp = jnp.zeros((F_in_p, F_out_p), W.dtype).at[:F_in, :F_out].set(W)
    bp = jnp.zeros((1, F_out_p), jnp.float32).at[0, :F_out].set(
        b.astype(jnp.float32))

    grid = (N_pad // TM, N_pad // TK)
    cparams = pltpu.CompilerParams(
        dimension_semantics=("parallel", "arbitrary"))

    # ---- pass 1: per-node inverse sqrt degree -----------------------------
    dinv = pl.pallas_call(
        degree_kernel,
        grid=grid,
        in_specs=[pl.BlockSpec((TM, TK), lambda i, k: (i, k))],
        out_specs=pl.BlockSpec((TM, 1), lambda i, k: (i, 0)),
        out_shape=jax.ShapeDtypeStruct((N_pad, 1), jnp.float32),
        compiler_params=cparams,
    )(Ap)

    project_first = F_out_p < F_in_p

    if project_first:
        # ---- pass 0: pre-project to the narrower width -------------------
        TKF = _pick_tile(F_in_p, cap=512)
        Hp = pl.pallas_call(
            xw_kernel,
            grid=(N_pad // TM, F_in_p // TKF),
            in_specs=[
                pl.BlockSpec((TM, TKF), lambda i, k: (i, k)),        # X
                pl.BlockSpec((TKF, F_out_p), lambda i, k: (k, 0)),   # W
            ],
            out_specs=pl.BlockSpec((TM, F_out_p), lambda i, k: (i, 0)),
            out_shape=jax.ShapeDtypeStruct((N_pad, F_out_p), jnp.float32),
            compiler_params=cparams,
        )(Xp, Wp)

        # ---- pass 2: normalized aggregation + bias ------------------------
        out_p = pl.pallas_call(
            gcn_agg_kernel,
            grid=grid,
            in_specs=[
                pl.BlockSpec((TM, TK), lambda i, k: (i, k)),          # A tile
                pl.BlockSpec((TK, F_out_p), lambda i, k: (k, 0)),     # H (contraction rows)
                pl.BlockSpec((TM, F_out_p), lambda i, k: (i, 0)),     # H (output rows)
                pl.BlockSpec((TK, 1), lambda i, k: (k, 0)),           # dinv (columns)
                pl.BlockSpec((TM, 1), lambda i, k: (i, 0)),           # dinv (rows)
                pl.BlockSpec((1, F_out_p), lambda i, k: (0, 0)),      # b
            ],
            out_specs=pl.BlockSpec((TM, F_out_p), lambda i, k: (i, 0)),
            out_shape=jax.ShapeDtypeStruct((N_pad, F_out_p), jnp.float32),
            compiler_params=cparams,
        )(Ap, Hp, Hp, dinv, dinv, bp)
    else:
        # ---- pass 2: normalized aggregation + fused linear layer ----------
        out_p = pl.pallas_call(
            gcn_agg_project_kernel,
            grid=grid,
            in_specs=[
                pl.BlockSpec((TM, TK), lambda i, k: (i, k)),          # A tile
                pl.BlockSpec((TK, F_in_p), lambda i, k: (k, 0)),      # X (contraction rows)
                pl.BlockSpec((TM, F_in_p), lambda i, k: (i, 0)),      # X (output rows)
                pl.BlockSpec((TK, 1), lambda i, k: (k, 0)),           # dinv (columns)
                pl.BlockSpec((TM, 1), lambda i, k: (i, 0)),           # dinv (rows)
                pl.BlockSpec((F_in_p, F_out_p), lambda i, k: (0, 0)), # W
                pl.BlockSpec((1, F_out_p), lambda i, k: (0, 0)),      # b
            ],
            out_specs=pl.BlockSpec((TM, F_out_p), lambda i, k: (i, 0)),
            out_shape=jax.ShapeDtypeStruct((N_pad, F_out_p), jnp.float32),
            scratch_shapes=[pltpu.VMEM((TM, F_in_p), jnp.float32)],
            compiler_params=cparams,
        )(Ap, Xp, Xp, dinv, dinv, Wp, bp)

    return out_p[:N, :F_out]


if __name__ == "__main__":
    def ref_gcn(A, X, W, b):
        n = A.shape[0]
        A_hat = A + jnp.eye(n, dtype=jnp.float32)
        d = 1.0 / jnp.sqrt(jnp.sum(A_hat, axis=1))
        A_norm = d[:, None] * A_hat * d[None, :]
        return (A_norm @ X) @ W + b

    def make_case(key, n, f_in, f_out):
        k_a, k_x, k_w, k_b = jax.random.split(key, 4)
        A_rand = jax.random.uniform(k_a, (n, n), dtype=jnp.float32)
        A = (A_rand + A_rand.T) * 0.5          # symmetric, non-negative
        X = jax.random.normal(k_x, (n, f_in), dtype=jnp.float32)
        bound = 1.0 / float(f_in) ** 0.5       # nn.Linear init range
        W = jax.random.uniform(k_w, (f_in, f_out), minval=-bound, maxval=bound,
                               dtype=jnp.float32)
        b = jax.random.uniform(k_b, (f_out,), minval=-bound, maxval=bound,
                               dtype=jnp.float32)
        return A, X, W, b

    key = jax.random.PRNGKey(0)
    k1, k2 = jax.random.split(key)

    # Case 1: N=8 nodes, in=16, out=32 -> aggregate-then-project path.
    A, X, W, b = make_case(k1, 8, 16, 32)
    out = jax.block_until_ready(gcn_layer(A, X, W, b))
    ref = ref_gcn(A, X, W, b)
    assert out.shape == ref.shape
    assert jnp.allclose(out, ref, atol=1e-4, rtol=1e-4), "case 1 mismatch"

    # Case 2: wide-in / narrow-out -> project-first path.
    A, X, W, b = make_case(k2, 8, 200, 24)
    out = jax.block_until_ready(gcn_layer(A, X, W, b))
    ref = ref_gcn(A, X, W, b)
    assert out.shape == ref.shape
    assert jnp.allclose(out, ref, atol=1e-4, rtol=1e-4), "case 2 mismatch"

    print("KERNEL_OK")
</pallas_src>

<mosaic_0001>
module attributes {stable_mosaic.version = 11 : i64} {
  func.func @degree_kernel(%arg0: i32, %arg1: i32, %arg2: memref<128x128xf32, #tpu.memory_space<vmem>>, %arg3: memref<128x1xf32, #tpu.memory_space<vmem>>) attributes {dimension_semantics = [#tpu.dimension_semantics<parallel>, #tpu.dimension_semantics<arbitrary>], iteration_bounds = array<i64: 1, 1>, scalar_prefetch = 0 : i64, scratch_operands = 0 : i64, tpu.core_type = #tpu.core_type<tc>, window_params = [{transform_indices = @transform_0, window_bounds = array<i64: 128, 128>}, {transform_indices = @transform_1, window_bounds = array<i64: 128, 1>}]} {
    %c0_i32 = arith.constant 0 : i32
    %0 = arith.cmpi eq, %arg1, %c0_i32 : i32
    %1 = arith.extui %0 : i1 to i32
    %c0_i32_0 = arith.constant 0 : i32
    %2 = arith.cmpi ne, %1, %c0_i32_0 : i32
    scf.if %2 {
      %cst_8 = arith.constant 0.000000e+00 : f32
      %12 = vector.broadcast %cst_8 : f32 to vector<128x1xf32>
      %c0_9 = arith.constant 0 : index
      %c0_10 = arith.constant 0 : index
      %13 = vector.load %arg3[%c0_9, %c0_10] : memref<128x1xf32, #tpu.memory_space<vmem>>, vector<128x1xf32>
      tpu.vector_store %arg3[%c0_9, %c0_10], %12 {strides = array<i32>} : memref<128x1xf32, #tpu.memory_space<vmem>>, vector<128x1xf32>,
    } else {
    }
    %c0 = arith.constant 0 : index
    %c0_1 = arith.constant 0 : index
    %3 = vector.load %arg3[%c0, %c0_1] : memref<128x1xf32, #tpu.memory_space<vmem>>, vector<128x1xf32>
    %c0_2 = arith.constant 0 : index
    %c0_3 = arith.constant 0 : index
    %4 = vector.load %arg2[%c0_2, %c0_3] : memref<128x128xf32, #tpu.memory_space<vmem>>, vector<128x128xf32>
    %cst = arith.constant dense<0.000000e+00> : vector<128xf32>
    %5 = vector.multi_reduction <add>, %4, %cst [1] : vector<128x128xf32> to vector<128xf32>
    %6 = vector.shape_cast %5 : vector<128xf32> to vector<128x1xf32>
    %7 = arith.addf %3, %6 : vector<128x1xf32>
    %c0_4 = arith.constant 0 : index
    %c0_5 = arith.constant 0 : index
    %8 = vector.load %arg3[%c0_4, %c0_5] : memref<128x1xf32, #tpu.memory_space<vmem>>, vector<128x1xf32>
    tpu.vector_store %arg3[%c0_4, %c0_5], %7 {strides = array<i32>} : memref<128x1xf32, #tpu.memory_space<vmem>>, vector<128x1xf32>,
    %c0_i32_6 = arith.constant 0 : i32
    %9 = arith.cmpi eq, %arg1, %c0_i32_6 : i32
    %10 = arith.extui %9 : i1 to i32
    %c0_i32_7 = arith.constant 0 : i32
    %11 = arith.cmpi ne, %10, %c0_i32_7 : i32
    scf.if %11 {
      %c0_8 = arith.constant 0 : index
      %c0_9 = arith.constant 0 : index
      %12 = vector.load %arg3[%c0_8, %c0_9] : memref<128x1xf32, #tpu.memory_space<vmem>>, vector<128x1xf32>
      %cst_10 = arith.constant 1.000000e+00 : f32
      %13 = vector.broadcast %cst_10 : f32 to vector<128x1xf32>
      %14 = arith.addf %12, %13 : vector<128x1xf32>
      %15 = math.rsqrt %14 : vector<128x1xf32>
      %c0_11 = arith.constant 0 : index
      %c0_12 = arith.constant 0 : index
      %16 = vector.load %arg3[%c0_11, %c0_12] : memref<128x1xf32, #tpu.memory_space<vmem>>, vector<128x1xf32>
      tpu.vector_store %arg3[%c0_11, %c0_12], %15 {strides = array<i32>} : memref<128x1xf32, #tpu.memory_space<vmem>>, vector<128x1xf32>,
    } else {
    }
    return
  }
  func.func @transform_0(%arg0: i32, %arg1: i32) -> (i32, i32) {
    %c0_i32 = arith.constant 0 : i32
    return %arg0, %arg1 : i32, i32
  }
  func.func @transform_1(%arg0: i32, %arg1: i32) -> (i32, i32) {
    %c0_i32 = arith.constant 0 : i32
    %c0_i32_0 = arith.constant 0 : i32
    return %arg0, %c0_i32 : i32, i32
  }
}

module attributes {stable_mosaic.version = 11 : i64} {
  func.func @gcn_agg_project_kernel(%arg0: i32, %arg1: i32, %arg2: memref<128x128xf32, #tpu.memory_space<vmem>>, %arg3: memref<128x128xf32, #tpu.memory_space<vmem>>, %arg4: memref<128x128xf32, #tpu.memory_space<vmem>>, %arg5: memref<128x1xf32, #tpu.memory_space<vmem>>, %arg6: memref<128x1xf32, #tpu.memory_space<vmem>>, %arg7: memref<128x128xf32, #tpu.memory_space<vmem>>, %arg8: memref<1x128xf32, #tpu.memory_space<vmem>>, %arg9: memref<128x128xf32, #tpu.memory_space<vmem>>, %arg10: memref<128x128xf32, #tpu.memory_space<vmem>>) attributes {dimension_semantics = [#tpu.dimension_semantics<parallel>, #tpu.dimension_semantics<arbitrary>], iteration_bounds = array<i64: 1, 1>, scalar_prefetch = 0 : i64, scratch_operands = 1 : i64, tpu.core_type = #tpu.core_type<tc>, window_params = [{transform_indices = @transform_0, window_bounds = array<i64: 128, 128>}, {transform_indices = @transform_1, window_bounds = array<i64: 128, 128>}, {transform_indices = @transform_2, window_bounds = array<i64: 128, 128>}, {transform_indices = @transform_3, window_bounds = array<i64: 128, 1>}, {transform_indices = @transform_4, window_bounds = array<i64: 128, 1>}, {pipeline_mode = #tpu.pipeline_mode<synchronous>, transform_indices = @transform_5, window_bounds = array<i64: 128, 128>}, {pipeline_mode = #tpu.pipeline_mode<synchronous>, transform_indices = @transform_6, window_bounds = array<i64: 1, 128>}, {transform_indices = @transform_7, window_bounds = array<i64: 128, 128>}]} {
    %c0_i32 = arith.constant 0 : i32
    %0 = arith.cmpi eq, %arg1, %c0_i32 : i32
    %1 = arith.extui %0 : i1 to i32
    %c0_i32_0 = arith.constant 0 : i32
    %2 = arith.cmpi ne, %1, %c0_i32_0 : i32
    scf.if %2 {
      %cst_12 = arith.constant 0.000000e+00 : f32
      %15 = vector.broadcast %cst_12 : f32 to vector<128x128xf32>
      %c0_13 = arith.constant 0 : index
      %c0_14 = arith.constant 0 : index
      %16 = vector.load %arg10[%c0_13, %c0_14] : memref<128x128xf32, #tpu.memory_space<vmem>>, vector<128x128xf32>
      tpu.vector_store %arg10[%c0_13, %c0_14], %15 {strides = array<i32>} : memref<128x128xf32, #tpu.memory_space<vmem>>, vector<128x128xf32>,
    } else {
    }
    %c0 = arith.constant 0 : index
    %c0_1 = arith.constant 0 : index
    %3 = vector.load %arg5[%c0, %c0_1] : memref<128x1xf32, #tpu.memory_space<vmem>>, vector<128x1xf32>
    %c0_2 = arith.constant 0 : index
    %c0_3 = arith.constant 0 : index
    %4 = vector.load %arg3[%c0_2, %c0_3] : memref<128x128xf32, #tpu.memory_space<vmem>>, vector<128x128xf32>
    %5 = vector.broadcast %3 : vector<128x1xf32> to vector<128x128xf32>
    %6 = arith.mulf %5, %4 : vector<128x128xf32>
    %c0_4 = arith.constant 0 : index
    %c0_5 = arith.constant 0 : index
    %7 = vector.load %arg10[%c0_4, %c0_5] : memref<128x128xf32, #tpu.memory_space<vmem>>, vector<128x128xf32>
    %c0_6 = arith.constant 0 : index
    %c0_7 = arith.constant 0 : index
    %8 = vector.load %arg2[%c0_6, %c0_7] : memref<128x128xf32, #tpu.memory_space<vmem>>, vector<128x128xf32>
    %cst = arith.constant dense<0.000000e+00> : vector<128x128xf32>
    %9 = tpu.matmul %8, %6, %cst {dimension_numbers = #tpu.dot_dimension_numbers<[1], [0], [0], [1], [0, 0, 1, 1], [], []>} : vector<128x128xf32>, vector<128x128xf32>, vector<128x128xf32> -> vector<128x128xf32>
    %10 = arith.addf %7, %9 : vector<128x128xf32>
    %c0_8 = arith.constant 0 : index
    %c0_9 = arith.constant 0 : index
    %11 = vector.load %arg10[%c0_8, %c0_9] : memref<128x128xf32, #tpu.memory_space<vmem>>, vector<128x128xf32>
    tpu.vector_store %arg10[%c0_8, %c0_9], %10 {strides = array<i32>} : memref<128x128xf32, #tpu.memory_space<vmem>>, vector<128x128xf32>,
    %c0_i32_10 = arith.constant 0 : i32
    %12 = arith.cmpi eq, %arg1, %c0_i32_10 : i32
    %13 = arith.extui %12 : i1 to i32
    %c0_i32_11 = arith.constant 0 : i32
    %14 = arith.cmpi ne, %13, %c0_i32_11 : i32
    scf.if %14 {
      %c0_12 = arith.constant 0 : index
      %c0_13 = arith.constant 0 : index
      %15 = vector.load %arg6[%c0_12, %c0_13] : memref<128x1xf32, #tpu.memory_space<vmem>>, vector<128x1xf32>
      %c0_14 = arith.constant 0 : index
      %c0_15 = arith.constant 0 : index
      %16 = vector.load %arg10[%c0_14, %c0_15] : memref<128x128xf32, #tpu.memory_space<vmem>>, vector<128x128xf32>
      %c0_16 = arith.constant 0 : index
      %c0_17 = arith.constant 0 : index
      %17 = vector.load %arg4[%c0_16, %c0_17] : memref<128x128xf32, #tpu.memory_space<vmem>>, vector<128x128xf32>
      %18 = vector.broadcast %15 : vector<128x1xf32> to vector<128x128xf32>
      %19 = arith.mulf %18, %17 : vector<128x128xf32>
      %20 = arith.addf %16, %19 : vector<128x128xf32>
      %21 = vector.broadcast %15 : vector<128x1xf32> to vector<128x128xf32>
      %22 = arith.mulf %21, %20 : vector<128x128xf32>
      %c0_18 = arith.constant 0 : index
      %c0_19 = arith.constant 0 : index
      %23 = vector.load %arg7[%c0_18, %c0_19] : memref<128x128xf32, #tpu.memory_space<vmem>>, vector<128x128xf32>
      %cst_20 = arith.constant dense<0.000000e+00> : vector<128x128xf32>
      %24 = tpu.matmul %22, %23, %cst_20 {dimension_numbers = #tpu.dot_dimension_numbers<[1], [0], [0], [1], [0, 0, 1, 1], [], []>} : vector<128x128xf32>, vector<128x128xf32>, vector<128x128xf32> -> vector<128x128xf32>
      %c0_21 = arith.constant 0 : index
      %c0_22 = arith.constant 0 : index
      %25 = vector.load %arg8[%c0_21, %c0_22] : memref<1x128xf32, #tpu.memory_space<vmem>>, vector<1x128xf32>
      %26 = vector.broadcast %25 : vector<1x128xf32> to vector<128x128xf32>
      %27 = arith.addf %24, %26 : vector<128x128xf32>
      %c0_23 = arith.constant 0 : index
      %c0_24 = arith.constant 0 : index
      %28 = vector.load %arg9[%c0_23, %c0_24] : memref<128x128xf32, #tpu.memory_space<vmem>>, vector<128x128xf32>
      tpu.vector_store %arg9[%c0_23, %c0_24], %27 {strides = array<i32>} : memref<128x128xf32, #tpu.memory_space<vmem>>, vector<128x128xf32>,
    } else {
    }
    return
  }
  func.func @transform_0(%arg0: i32, %arg1: i32) -> (i32, i32) {
    %c0_i32 = arith.constant 0 : i32
    return %arg0, %arg1 : i32, i32
  }
  func.func @transform_1(%arg0: i32, %arg1: i32) -> (i32, i32) {
    %c0_i32 = arith.constant 0 : i32
    %c0_i32_0 = arith.constant 0 : i32
    return %arg1, %c0_i32 : i32, i32
  }
  func.func @transform_2(%arg0: i32, %arg1: i32) -> (i32, i32) {
    %c0_i32 = arith.constant 0 : i32
    %c0_i32_0 = arith.constant 0 : i32
    return %arg0, %c0_i32 : i32, i32
  }
  func.func @transform_3(%arg0: i32, %arg1: i32) -> (i32, i32) {
    %c0_i32 = arith.constant 0 : i32
    %c0_i32_0 = arith.constant 0 : i32
    return %arg1, %c0_i32 : i32, i32
  }
  func.func @transform_4(%arg0: i32, %arg1: i32) -> (i32, i32) {
    %c0_i32 = arith.constant 0 : i32
    %c0_i32_0 = arith.constant 0 : i32
    return %arg0, %c0_i32 : i32, i32
  }
  func.func @transform_5(%arg0: i32, %arg1: i32) -> (i32, i32) {
    %c0_i32 = arith.constant 0 : i32
    %c0_i32_0 = arith.constant 0 : i32
    %c0_i32_1 = arith.constant 0 : i32
    return %c0_i32, %c0_i32_0 : i32, i32
  }
  func.func @transform_6(%arg0: i32, %arg1: i32) -> (i32, i32) {
    %c0_i32 = arith.constant 0 : i32
    %c0_i32_0 = arith.constant 0 : i32
    %c0_i32_1 = arith.constant 0 : i32
    return %c0_i32, %c0_i32_0 : i32, i32
  }
  func.func @transform_7(%arg0: i32, %arg1: i32) -> (i32, i32) {
    %c0_i32 = arith.constant 0 : i32
    %c0_i32_0 = arith.constant 0 : i32
    return %arg0, %c0_i32 : i32, i32
  }
}

</mosaic_0001>

<llo_original>
// kernel: gcn_layer.2
$region0: #{gcn_layer.2}
  #allocation0 [shape = 'u32[]', space=smem, size = 0x4, offset = 0x4, fixed_abs, tag = 'smem constant byte address 0x4 - core index']
  #allocation1 [shape = 'u32[144,128]{1,0:T(1,128)}', space=vmem, size = 0x12000, scoped, tag = 'internal scratch']
  %s0 = inlined_call_operand.vmem [shape: f32[128,128], index: 0, kind: input, shape index: {}]
  %s1 = inlined_call_operand.vmem [shape: f32[128,1], index: 1, kind: output, shape index: {}]
  %s2 = sld [smem:[#allocation0]]
  $region22: #{gcn_layer.2} parent=0
    _
  %s4 = ssub.s32 1, %s2
  %s5 = scalar_select 0, %s4, %s2
  // Predicated region
  $region2: #{gcn_layer.2} parent=0 // pred_check
    _
  $region3: #{gcn_layer.2} parent=0 // pred_check_branch
    %7 = sbr.rel (0) target = $region5
  $region4: #{gcn_layer.2} parent=0 // pred_region
    _
  $region5: #{gcn_layer.2} parent=0 // pred_fallthru
    _
  %p8 = scmp.eq.s32.totalorder 0, 0
  // Predicated region
  $region6: #{gcn_layer.2} parent=0 // pred_check
    %p9 = pneg %p8
  $region7: #{gcn_layer.2} parent=0 // pred_check_branch
    %11 = sbr.rel (%p9) target = $region9
  $region8: #{gcn_layer.2} parent=0 // pred_region
    %vm12 = vcmask 7168
    %13 = vst.msk [vmem:[%s1] sm:$0xff] %vm12, 0.0
    %14 = vst.msk [vmem:[%s1 + $0x8] sm:$0xff] %vm12, 0.0
    %15 = vst.msk [vmem:[%s1 + $0x10] sm:$0xff] %vm12, 0.0
    %16 = vst.msk [vmem:[%s1 + $0x18] sm:$0xff] %vm12, 0.0
    %17 = vst.msk [vmem:[%s1 + $0x20] sm:$0xff] %vm12, 0.0
    %18 = vst.msk [vmem:[%s1 + $0x28] sm:$0xff] %vm12, 0.0
    %19 = vst.msk [vmem:[%s1 + $0x30] sm:$0xff] %vm12, 0.0
    %20 = vst.msk [vmem:[%s1 + $0x38] sm:$0xff] %vm12, 0.0
    %21 = vst.msk [vmem:[%s1 + $0x40] sm:$0xff] %vm12, 0.0
    %22 = vst.msk [vmem:[%s1 + $0x48] sm:$0xff] %vm12, 0.0
    %23 = vst.msk [vmem:[%s1 + $0x50] sm:$0xff] %vm12, 0.0
    %24 = vst.msk [vmem:[%s1 + $0x58] sm:$0xff] %vm12, 0.0
    %25 = vst.msk [vmem:[%s1 + $0x60] sm:$0xff] %vm12, 0.0
    %26 = vst.msk [vmem:[%s1 + $0x68] sm:$0xff] %vm12, 0.0
    %27 = vst.msk [vmem:[%s1 + $0x70] sm:$0xff] %vm12, 0.0
    %28 = vst.msk [vmem:[%s1 + $0x78] sm:$0xff] %vm12, 0.0
  $region9: #{gcn_layer.2} parent=0 // pred_fallthru
    _
  %v29 = vld [vmem:[%s1] sm:$0xff]
  %v30 = vld [vmem:[%s1 + $0x8] sm:$0xff]
  %v31 = vld [vmem:[%s1 + $0x10] sm:$0xff]
  %v32 = vld [vmem:[%s1 + $0x18] sm:$0xff]
  %v33 = vld [vmem:[%s1 + $0x20] sm:$0xff]
  %v34 = vld [vmem:[%s1 + $0x28] sm:$0xff]
  %v35 = vld [vmem:[%s1 + $0x30] sm:$0xff]
  %v36 = vld [vmem:[%s1 + $0x38] sm:$0xff]
  %v37 = vld [vmem:[%s1 + $0x40] sm:$0xff]
  %v38 = vld [vmem:[%s1 + $0x48] sm:$0xff]
  %v39 = vld [vmem:[%s1 + $0x50] sm:$0xff]
  %v40 = vld [vmem:[%s1 + $0x58] sm:$0xff]
  %v41 = vld [vmem:[%s1 + $0x60] sm:$0xff]
  %v42 = vld [vmem:[%s1 + $0x68] sm:$0xff]
  %v43 = vld [vmem:[%s1 + $0x70] sm:$0xff]
  %v44 = vld [vmem:[%s1 + $0x78] sm:$0xff]
  %v45 = vld [vmem:[%s0] sm:$0xff]
  %v46 = vld [vmem:[%s0 + $0x8] sm:$0xff]
  %v47 = vld [vmem:[%s0 + $0x10] sm:$0xff]
  %v48 = vld [vmem:[%s0 + $0x18] sm:$0xff]
  %v49 = vld [vmem:[%s0 + $0x20] sm:$0xff]
  %v50 = vld [vmem:[%s0 + $0x28] sm:$0xff]
  %v51 = vld [vmem:[%s0 + $0x30] sm:$0xff]
  %v52 = vld [vmem:[%s0 + $0x38] sm:$0xff]
  %v53 = vld [vmem:[%s0 + $0x40] sm:$0xff]
  %v54 = vld [vmem:[%s0 + $0x48] sm:$0xff]
  %v55 = vld [vmem:[%s0 + $0x50] sm:$0xff]
  %v56 = vld [vmem:[%s0 + $0x58] sm:$0xff]
  %v57 = vld [vmem:[%s0 + $0x60] sm:$0xff]
  %v58 = vld [vmem:[%s0 + $0x68] sm:$0xff]
  %v59 = vld [vmem:[%s0 + $0x70] sm:$0xff]
  %v60 = vld [vmem:[%s0 + $0x78] sm:$0xff]
  %61 = vadd.xlane.f32.xlu0 %v45
  %v62 = vpop.xlane.xlu0 %61
  %63 = vadd.xlane.f32.xlu0 %v46
  %v64 = vpop.xlane.xlu0 %63
  %65 = vadd.xlane.f32.xlu0 %v47
  %v66 = vpop.xlane.xlu0 %65
  %67 = vadd.xlane.f32.xlu0 %v48
  %v68 = vpop.xlane.xlu0 %67
  %69 = vadd.xlane.f32.xlu0 %v49
  %v70 = vpop.xlane.xlu0 %69
  %71 = vadd.xlane.f32.xlu0 %v50
  %v72 = vpop.xlane.xlu0 %71
  %73 = vadd.xlane.f32.xlu0 %v51
  %v74 = vpop.xlane.xlu0 %73
  %75 = vadd.xlane.f32.xlu0 %v52
  %v76 = vpop.xlane.xlu0 %75
  %77 = vadd.xlane.f32.xlu0 %v53
  %v78 = vpop.xlane.xlu0 %77
  %79 = vadd.xlane.f32.xlu0 %v54
  %v80 = vpop.xlane.xlu0 %79
  %81 = vadd.xlane.f32.xlu0 %v55
  %v82 = vpop.xlane.xlu0 %81
  %83 = vadd.xlane.f32.xlu0 %v56
  %v84 = vpop.xlane.xlu0 %83
  %85 = vadd.xlane.f32.xlu0 %v57
  %v86 = vpop.xlane.xlu0 %85
  %87 = vadd.xlane.f32.xlu0 %v58
  %v88 = vpop.xlane.xlu0 %87
  %89 = vadd.xlane.f32.xlu0 %v59
  %v90 = vpop.xlane.xlu0 %89
  %91 = vadd.xlane.f32.xlu0 %v60
  %v92 = vpop.xlane.xlu0 %91
  %v93 = vadd.f32 %v29, %v62
  %v94 = vadd.f32 %v30, %v64
  %v95 = vadd.f32 %v31, %v66
  %v96 = vadd.f32 %v32, %v68
  %v97 = vadd.f32 %v33, %v70
  %v98 = vadd.f32 %v34, %v72
  %v99 = vadd.f32 %v35, %v74
  %v100 = vadd.f32 %v36, %v76
  %v101 = vadd.f32 %v37, %v78
  %v102 = vadd.f32 %v38, %v80
  %v103 = vadd.f32 %v39, %v82
  %v104 = vadd.f32 %v40, %v84
  %v105 = vadd.f32 %v41, %v86
  %v106 = vadd.f32 %v42, %v88
  %v107 = vadd.f32 %v43, %v90
  %v108 = vadd.f32 %v44, %v92
  %vm109 = vcmask 7168
  %110 = vst.msk [vmem:[%s1] sm:$0xff] %vm109, %v93
  %111 = vst.msk [vmem:[%s1 + $0x8] sm:$0xff] %vm109, %v94
  %112 = vst.msk [vmem:[%s1 + $0x10] sm:$0xff] %vm109, %v95
  %113 = vst.msk [vmem:[%s1 + $0x18] sm:$0xff] %vm109, %v96
  %114 = vst.msk [vmem:[%s1 + $0x20] sm:$0xff] %vm109, %v97
  %115 = vst.msk [vmem:[%s1 + $0x28] sm:$0xff] %vm109, %v98
  %116 = vst.msk [vmem:[%s1 + $0x30] sm:$0xff] %vm109, %v99
  %117 = vst.msk [vmem:[%s1 + $0x38] sm:$0xff] %vm109, %v100
  %118 = vst.msk [vmem:[%s1 + $0x40] sm:$0xff] %vm109, %v101
  %119 = vst.msk [vmem:[%s1 + $0x48] sm:$0xff] %vm109, %v102
  %120 = vst.msk [vmem:[%s1 + $0x50] sm:$0xff] %vm109, %v103
  %121 = vst.msk [vmem:[%s1 + $0x58] sm:$0xff] %vm109, %v104
  %122 = vst.msk [vmem:[%s1 + $0x60] sm:$0xff] %vm109, %v105
  %123 = vst.msk [vmem:[%s1 + $0x68] sm:$0xff] %vm109, %v106
  %124 = vst.msk [vmem:[%s1 + $0x70] sm:$0xff] %vm109, %v107
  %125 = vst.msk [vmem:[%s1 + $0x78] sm:$0xff] %vm109, %v108
  // Predicated region
  $region10: #{gcn_layer.2} parent=0 // pred_check
    %p126 = pneg %p8
  $region11: #{gcn_layer.2} parent=0 // pred_check_branch
    %128 = sbr.rel (%p126) target = $region13
  $region12: #{gcn_layer.2} parent=0 // pred_region
    %v129 = vld [vmem:[%s1] sm:$0xff]
    %v130 = vld [vmem:[%s1 + $0x8] sm:$0xff]
    %v131 = vld [vmem:[%s1 + $0x10] sm:$0xff]
    %v132 = vld [vmem:[%s1 + $0x18] sm:$0xff]
    %v133 = vld [vmem:[%s1 + $0x20] sm:$0xff]
    %v134 = vld [vmem:[%s1 + $0x28] sm:$0xff]
    %v135 = vld [vmem:[%s1 + $0x30] sm:$0xff]
    %v136 = vld [vmem:[%s1 + $0x38] sm:$0xff]
    %v137 = vld [vmem:[%s1 + $0x40] sm:$0xff]
    %v138 = vld [vmem:[%s1 + $0x48] sm:$0xff]
    %v139 = vld [vmem:[%s1 + $0x50] sm:$0xff]
    %v140 = vld [vmem:[%s1 + $0x58] sm:$0xff]
    %v141 = vld [vmem:[%s1 + $0x60] sm:$0xff]
    %v142 = vld [vmem:[%s1 + $0x68] sm:$0xff]
    %v143 = vld [vmem:[%s1 + $0x70] sm:$0xff]
    %v144 = vld [vmem:[%s1 + $0x78] sm:$0xff]
    %v145 = vadd.f32 %v129, 1.0
    %v146 = vadd.f32 %v130, 1.0
    %v147 = vadd.f32 %v131, 1.0
    %v148 = vadd.f32 %v132, 1.0
    %v149 = vadd.f32 %v133, 1.0
    %v150 = vadd.f32 %v134, 1.0
    %v151 = vadd.f32 %v135, 1.0
    %v152 = vadd.f32 %v136, 1.0
    %v153 = vadd.f32 %v137, 1.0
    %v154 = vadd.f32 %v138, 1.0
    %v155 = vadd.f32 %v139, 1.0
    %v156 = vadd.f32 %v140, 1.0
    %v157 = vadd.f32 %v141, 1.0
    %v158 = vadd.f32 %v142, 1.0
    %v159 = vadd.f32 %v143, 1.0
    %v160 = vadd.f32 %v144, 1.0
    %v161 = vrsqrt.pop %v145
    %v162 = vrsqrt.pop %v146
    %v163 = vrsqrt.pop %v147
    %v164 = vrsqrt.pop %v148
    %v165 = vrsqrt.pop %v149
    %v166 = vrsqrt.pop %v150
    %v167 = vrsqrt.pop %v151
    %v168 = vrsqrt.pop %v152
    %v169 = vrsqrt.pop %v153
    %v170 = vrsqrt.pop %v154
    %v171 = vrsqrt.pop %v155
    %v172 = vrsqrt.pop %v156
    %v173 = vrsqrt.pop %v157
    %v174 = vrsqrt.pop %v158
    %v175 = vrsqrt.pop %v159
    %v176 = vrsqrt.pop %v160
    %177 = vst.msk [vmem:[%s1] sm:$0xff] %vm109, %v161
    %178 = vst.msk [vmem:[%s1 + $0x8] sm:$0xff] %vm109, %v162
    %179 = vst.msk [vmem:[%s1 + $0x10] sm:$0xff] %vm109, %v163
    %180 = vst.msk [vmem:[%s1 + $0x18] sm:$0xff] %vm109, %v164
    %181 = vst.msk [vmem:[%s1 + $0x20] sm:$0xff] %vm109, %v165
    %182 = vst.msk [vmem:[%s1 + $0x28] sm:$0xff] %vm109, %v166
    %183 = vst.msk [vmem:[%s1 + $0x30] sm:$0xff] %vm109, %v167
    %184 = vst.msk [vmem:[%s1 + $0x38] sm:$0xff] %vm109, %v168
    %185 = vst.msk [vmem:[%s1 + $0x40] sm:$0xff] %vm109, %v169
    %186 = vst.msk [vmem:[%s1 + $0x48] sm:$0xff] %vm109, %v170
    %187 = vst.msk [vmem:[%s1 + $0x50] sm:$0xff] %vm109, %v171
    %188 = vst.msk [vmem:[%s1 + $0x58] sm:$0xff] %vm109, %v172
    %189 = vst.msk [vmem:[%s1 + $0x60] sm:$0xff] %vm109, %v173
    %190 = vst.msk [vmem:[%s1 + $0x68] sm:$0xff] %vm109, %v174
    %191 = vst.msk [vmem:[%s1 + $0x70] sm:$0xff] %vm109, %v175
    %192 = vst.msk [vmem:[%s1 + $0x78] sm:$0xff] %vm109, %v176
  $region13: #{gcn_layer.2} parent=0 // pred_fallthru
    _
  // Predicated region
  $region14: #{gcn_layer.2} parent=0 // pred_check
    _
  $region15: #{gcn_layer.2} parent=0 // pred_check_branch
    %194 = sbr.rel (0) target = $region17
  $region16: #{gcn_layer.2} parent=0 // pred_region
    _
  $region17: #{gcn_layer.2} parent=0 // pred_fallthru
    _
  // Predicated region
  $region18: #{gcn_layer.2} parent=0 // pred_check
    _
  $region19: #{gcn_layer.2} parent=0 // pred_check_branch
    %196 = sbr.rel (0) target = $region21
  $region20: #{gcn_layer.2} parent=0 // pred_region
    _
  $region21: #{gcn_layer.2} parent=0 // pred_fallthru
    _

// kernel: gcn_layer.3
$region0: #{gcn_layer.3}
  #allocation0 [shape = 'u32[]', space=smem, size = 0x4, offset = 0x4, fixed_abs, tag = 'smem constant byte address 0x4 - core index']
  #allocation1 [shape = 'u32[144,128]{1,0:T(1,128)}', space=vmem, size = 0x12000, scoped, tag = 'internal scratch']
  #allocation2 [shape = 'f32[128,128]{1,0:T(8,128)}', space=vmem, size = 0x10000, scoped, tag = 'scratch operand']
  %s0 = inlined_call_operand.vmem [shape: f32[128,128], index: 0, kind: input, shape index: {}]
  %s1 = inlined_call_operand.vmem [shape: f32[128,128], index: 1, kind: input, shape index: {}, may-alias: {1,2}]
  %s2 = inlined_call_operand.vmem [shape: f32[128,128], index: 2, kind: input, shape index: {}, may-alias: {1,2}]
  %s3 = inlined_call_operand.vmem [shape: f32[128,1], index: 3, kind: input, shape index: {}, may-alias: {3,4}]
  %s4 = inlined_call_operand.vmem [shape: f32[128,1], index: 4, kind: input, shape index: {}, may-alias: {3,4}]
  %s5 = inlined_call_operand.vmem [shape: f32[128,128], index: 5, kind: input, shape index: {}]
  %s6 = inlined_call_operand.vmem [shape: f32[1,128], index: 6, kind: input, shape index: {}]
  %s7 = inlined_call_operand.vmem [shape: f32[128,128], index: 7, kind: output, shape index: {}]
  %s8 = sld [smem:[#allocation0]]
  $region46: #{gcn_layer.3} parent=0
    _
  %s10 = ssub.s32 1, %s8
  %s11 = scalar_select 0, %s10, %s8
  // Predicated region
  $region2: #{gcn_layer.3} parent=0 // pred_check
    _
  $region3: #{gcn_layer.3} parent=0 // pred_check_branch
    %13 = sbr.rel (0) target = $region5
  $region4: #{gcn_layer.3} parent=0 // pred_region
    _
  $region5: #{gcn_layer.3} parent=0 // pred_fallthru
    _
  // Predicated region
  $region6: #{gcn_layer.3} parent=0 // pred_check
    _
  $region7: #{gcn_layer.3} parent=0 // pred_check_branch
    %15 = sbr.rel (0) target = $region9
  $region8: #{gcn_layer.3} parent=0 // pred_region
    _
  $region9: #{gcn_layer.3} parent=0 // pred_fallthru
    _
  // Predicated region
  $region10: #{gcn_layer.3} parent=0 // pred_check
    _
  $region11: #{gcn_layer.3} parent=0 // pred_check_branch
    %17 = sbr.rel (0) target = $region13
  $region12: #{gcn_layer.3} parent=0 // pred_region
    _
  $region13: #{gcn_layer.3} parent=0 // pred_fallthru
    _
  // Predicated region
  $region14: #{gcn_layer.3} parent=0 // pred_check
    _
  $region15: #{gcn_layer.3} parent=0 // pred_check_branch
    %19 = sbr.rel (0) target = $region17
  $region16: #{gcn_layer.3} parent=0 // pred_region
    _
  $region17: #{gcn_layer.3} parent=0 // pred_fallthru
    _
  // Predicated region
  $region18: #{gcn_layer.3} parent=0 // pred_check
    _
  $region19: #{gcn_layer.3} parent=0 // pred_check_branch
    %21 = sbr.rel (0) target = $region21
  $region20: #{gcn_layer.3} parent=0 // pred_region
    _
  $region21: #{gcn_layer.3} parent=0 // pred_fallthru
    _
  // Predicated region
  $region22: #{gcn_layer.3} parent=0 // pred_check
    _
  $region23: #{gcn_layer.3} parent=0 // pred_check_branch
    %23 = sbr.rel (0) target = $region25
  $region24: #{gcn_layer.3} parent=0 // pred_region
    _
  $region25: #{gcn_layer.3} parent=0 // pred_fallthru
    _
  // Predicated region
  $region26: #{gcn_layer.3} parent=0 // pred_check
    _
  $region27: #{gcn_layer.3} parent=0 // pred_check_branch
    %25 = sbr.rel (0) target = $region29
  $region28: #{gcn_layer.3} parent=0 // pred_region
    _
  $region29: #{gcn_layer.3} parent=0 // pred_fallthru
    _
  %p26 = scmp.eq.s32.totalorder 0, 0
  // Predicated region
  $region30: #{gcn_layer.3} parent=0 // pred_check
    %p27 = pneg %p26
  $region31: #{gcn_layer.3} parent=0 // pred_check_branch
    %29 = sbr.rel (%p27) target = $region33
  $region32: #{gcn_layer.3} parent=0 // pred_region
    %30 = vst [vmem:[#allocation2] sm:$0xff] 0.0
    %31 = vst [vmem:[#allocation2 + $0x8] sm:$0xff] 0.0
    %32 = vst [vmem:[#allocation2 + $0x10] sm:$0xff] 0.0
    %33 = vst [vmem:[#allocation2 + $0x18] sm:$0xff] 0.0
    %34 = vst [vmem:[#allocation2 + $0x20] sm:$0xff] 0.0
    %35 = vst [vmem:[#allocation2 + $0x28] sm:$0xff] 0.0
    %36 = vst [vmem:[#allocation2 + $0x30] sm:$0xff] 0.0
    %37 = vst [vmem:[#allocation2 + $0x38] sm:$0xff] 0.0
    %38 = vst [vmem:[#allocation2 + $0x40] sm:$0xff] 0.0
    %39 = vst [vmem:[#allocation2 + $0x48] sm:$0xff] 0.0
    %40 = vst [vmem:[#allocation2 + $0x50] sm:$0xff] 0.0
    %41 = vst [vmem:[#allocation2 + $0x58] sm:$0xff] 0.0
    %42 = vst [vmem:[#allocation2 + $0x60] sm:$0xff] 0.0
    %43 = vst [vmem:[#allocation2 + $0x68] sm:$0xff] 0.0
    %44 = vst [vmem:[#allocation2 + $0x70] sm:$0xff] 0.0
    %45 = vst [vmem:[#allocation2 + $0x78] sm:$0xff] 0.0
  $region33: #{gcn_layer.3} parent=0 // pred_fallthru
    _
  %v46 = vld [vmem:[%s3] sm:$0xff]
  %v47 = vld [vmem:[%s3 + $0x8] sm:$0xff]
  %v48 = vld [vmem:[%s3 + $0x10] sm:$0xff]
  %v49 = vld [vmem:[%s3 + $0x18] sm:$0xff]
  %v50 = vld [vmem:[%s3 + $0x20] sm:$0xff]
  %v51 = vld [vmem:[%s3 + $0x28] sm:$0xff]
  %v52 = vld [vmem:[%s3 + $0x30] sm:$0xff]
  %v53 = vld [vmem:[%s3 + $0x38] sm:$0xff]
  %v54 = vld [vmem:[%s3 + $0x40] sm:$0xff]
  %v55 = vld [vmem:[%s3 + $0x48] sm:$0xff]
  %v56 = vld [vmem:[%s3 + $0x50] sm:$0xff]
  %v57 = vld [vmem:[%s3 + $0x58] sm:$0xff]
  %v58 = vld [vmem:[%s3 + $0x60] sm:$0xff]
  %v59 = vld [vmem:[%s3 + $0x68] sm:$0xff]
  %v60 = vld [vmem:[%s3 + $0x70] sm:$0xff]
  %v61 = vld [vmem:[%s3 + $0x78] sm:$0xff]
  %v62 = vld [vmem:[%s1] sm:$0xff]
  %v63 = vld [vmem:[%s1 + $0x8] sm:$0xff]
  %v64 = vld [vmem:[%s1 + $0x10] sm:$0xff]
  %v65 = vld [vmem:[%s1 + $0x18] sm:$0xff]
  %v66 = vld [vmem:[%s1 + $0x20] sm:$0xff]
  %v67 = vld [vmem:[%s1 + $0x28] sm:$0xff]
  %v68 = vld [vmem:[%s1 + $0x30] sm:$0xff]
  %v69 = vld [vmem:[%s1 + $0x38] sm:$0xff]
  %v70 = vld [vmem:[%s1 + $0x40] sm:$0xff]
  %v71 = vld [vmem:[%s1 + $0x48] sm:$0xff]
  %v72 = vld [vmem:[%s1 + $0x50] sm:$0xff]
  %v73 = vld [vmem:[%s1 + $0x58] sm:$0xff]
  %v74 = vld [vmem:[%s1 + $0x60] sm:$0xff]
  %v75 = vld [vmem:[%s1 + $0x68] sm:$0xff]
  %v76 = vld [vmem:[%s1 + $0x70] sm:$0xff]
  %v77 = vld [vmem:[%s1 + $0x78] sm:$0xff]
  %79 = vset.pattern.permute.xlu0 0
  %80 = vperm.xlu0 %79, %v46
  %v81 = vpop.permute.xlu0 %80
  %84 = vset.pattern.permute.xlu0 0
  %85 = vperm.xlu0 %84, %v47
  %v86 = vpop.permute.xlu0 %85
  %89 = vset.pattern.permute.xlu0 0
  %90 = vperm.xlu0 %89, %v48
  %v91 = vpop.permute.xlu0 %90
  %94 = vset.pattern.permute.xlu0 0
  %95 = vperm.xlu0 %94, %v49
  %v96 = vpop.permute.xlu0 %95
  %99 = vset.pattern.permute.xlu0 0
  %100 = vperm.xlu0 %99, %v50
  %v101 = vpop.permute.xlu0 %100
  %104 = vset.pattern.permute.xlu0 0
  %105 = vperm.xlu0 %104, %v51
  %v106 = vpop.permute.xlu0 %105
  %109 = vset.pattern.permute.xlu0 0
  %110 = vperm.xlu0 %109, %v52
  %v111 = vpop.permute.xlu0 %110
  %114 = vset.pattern.permute.xlu0 0
  %115 = vperm.xlu0 %114, %v53
  %v116 = vpop.permute.xlu0 %115
  %119 = vset.pattern.permute.xlu0 0
  %120 = vperm.xlu0 %119, %v54
  %v121 = vpop.permute.xlu0 %120
  %124 = vset.pattern.permute.xlu0 0
  %125 = vperm.xlu0 %124, %v55
  %v126 = vpop.permute.xlu0 %125
  %129 = vset.pattern.permute.xlu0 0
  %130 = vperm.xlu0 %129, %v56
  %v131 = vpop.permute.xlu0 %130
  %134 = vset.pattern.permute.xlu0 0
  %135 = vperm.xlu0 %134, %v57
  %v136 = vpop.permute.xlu0 %135
  %139 = vset.pattern.permute.xlu0 0
  %140 = vperm.xlu0 %139, %v58
  %v141 = vpop.permute.xlu0 %140
  %144 = vset.pattern.permute.xlu0 0
  %145 = vperm.xlu0 %144, %v59
  %v146 = vpop.permute.xlu0 %145
  %149 = vset.pattern.permute.xlu0 0
  %150 = vperm.xlu0 %149, %v60
  %v151 = vpop.permute.xlu0 %150
  %154 = vset.pattern.permute.xlu0 0
  %155 = vperm.xlu0 %154, %v61
  %v156 = vpop.permute.xlu0 %155
  %v158 = vmul.f32 %v81, %v62
  %v159 = vmul.f32 %v86, %v63
  %v160 = vmul.f32 %v91, %v64
  %v161 = vmul.f32 %v96, %v65
  %v162 = vmul.f32 %v101, %v66
  %v163 = vmul.f32 %v106, %v67
  %v164 = vmul.f32 %v111, %v68
  %v165 = vmul.f32 %v116, %v69
  %v166 = vmul.f32 %v121, %v70
  %v167 = vmul.f32 %v126, %v71
  %v168 = vmul.f32 %v131, %v72
  %v169 = vmul.f32 %v136, %v73
  %v170 = vmul.f32 %v141, %v74
  %v171 = vmul.f32 %v146, %v75
  %v172 = vmul.f32 %v151, %v76
  %v173 = vmul.f32 %v156, %v77
  %v174 = vld [vmem:[#allocation2] sm:$0xff]
  %v175 = vld [vmem:[#allocation2 + $0x8] sm:$0xff]
  %v176 = vld [vmem:[#allocation2 + $0x10] sm:$0xff]
  %v177 = vld [vmem:[#allocation2 + $0x18] sm:$0xff]
  %v178 = vld [vmem:[#allocation2 + $0x20] sm:$0xff]
  %v179 = vld [vmem:[#allocation2 + $0x28] sm:$0xff]
  %v180 = vld [vmem:[#allocation2 + $0x30] sm:$0xff]
  %v181 = vld [vmem:[#allocation2 + $0x38] sm:$0xff]
  %v182 = vld [vmem:[#allocation2 + $0x40] sm:$0xff]
  %v183 = vld [vmem:[#allocation2 + $0x48] sm:$0xff]
  %v184 = vld [vmem:[#allocation2 + $0x50] sm:$0xff]
  %v185 = vld [vmem:[#allocation2 + $0x58] sm:$0xff]
  %v186 = vld [vmem:[#allocation2 + $0x60] sm:$0xff]
  %v187 = vld [vmem:[#allocation2 + $0x68] sm:$0xff]
  %v188 = vld [vmem:[#allocation2 + $0x70] sm:$0xff]
  %v189 = vld [vmem:[#allocation2 + $0x78] sm:$0xff]
  %v190 = vld [vmem:[%s0] sm:$0xff]
  %v191 = vld [vmem:[%s0 + $0x8] sm:$0xff]
  %v192 = vld [vmem:[%s0 + $0x10] sm:$0xff]
  %v193 = vld [vmem:[%s0 + $0x18] sm:$0xff]
  %v194 = vld [vmem:[%s0 + $0x20] sm:$0xff]
  %v195 = vld [vmem:[%s0 + $0x28] sm:$0xff]
  %v196 = vld [vmem:[%s0 + $0x30] sm:$0xff]
  %v197 = vld [vmem:[%s0 + $0x38] sm:$0xff]
  %v198 = vld [vmem:[%s0 + $0x40] sm:$0xff]
  %v199 = vld [vmem:[%s0 + $0x48] sm:$0xff]
  %v200 = vld [vmem:[%s0 + $0x50] sm:$0xff]
  %v201 = vld [vmem:[%s0 + $0x58] sm:$0xff]
  %v202 = vld [vmem:[%s0 + $0x60] sm:$0xff]
  %v203 = vld [vmem:[%s0 + $0x68] sm:$0xff]
  %v204 = vld [vmem:[%s0 + $0x70] sm:$0xff]
  %v205 = vld [vmem:[%s0 + $0x78] sm:$0xff]
  %206 = vmatprep.subr.mxu0 0.0
  %207 = vmatpush1.msra.mxu0 %v158
  %208 = vmatprep.subr.mxu0 0.0
  %209 = vmatpush1.msra.mxu0 %v159
  %210 = vmatprep.subr.mxu0 0.0
  %211 = vmatpush1.msra.mxu0 %v160
  %212 = vmatprep.subr.mxu0 0.0
  %213 = vmatpush1.msra.mxu0 %v161
  %214 = vmatprep.subr.mxu0 0.0
  %215 = vmatpush1.msra.mxu0 %v162
  %216 = vmatprep.subr.mxu0 0.0
  %217 = vmatpush1.msra.mxu0 %v163
  %218 = vmatprep.subr.mxu0 0.0
  %219 = vmatpush1.msra.mxu0 %v164
  %220 = vmatprep.subr.mxu0 0.0
  %221 = vmatpush1.msra.mxu0 %v165
  %222 = vmatprep.subr.mxu0 0.0
  %223 = vmatpush1.msra.mxu0 %v166
  %224 = vmatprep.subr.mxu0 0.0
  %225 = vmatpush1.msra.mxu0 %v167
  %226 = vmatprep.subr.mxu0 0.0
  %227 = vmatpush1.msra.mxu0 %v168
  %228 = vmatprep.subr.mxu0 0.0
  %229 = vmatpush1.msra.mxu0 %v169
  %230 = vmatprep.subr.mxu0 0.0
  %231 = vmatpush1.msra.mxu0 %v170
  %232 = vmatprep.subr.mxu0 0.0
  %233 = vmatpush1.msra.mxu0 %v171
  %234 = vmatprep.subr.mxu0 0.0
  %235 = vmatpush1.msra.mxu0 %v172
  %236 = vmatprep.subr.mxu0 0.0
  %237 = vmatpush1.msra.mxu0 %v173
  %238 = vmatprep.subr.mxu0 0.0
  %239 = vmatpush1.msra.mxu0 0.0
  %240 = vmatprep.subr.mxu0 0.0
  %241 = vmatpush1.msra.mxu0 0.0
  %242 = vmatprep.subr.mxu0 0.0
  %243 = vmatpush1.msra.mxu0 0.0
  %244 = vmatprep.subr.mxu0 0.0
  %245 = vmatpush1.msra.mxu0 0.0
  %246 = vmatprep.subr.mxu0 0.0
  %247 = vmatpush1.msra.mxu0 0.0
  %248 = vmatprep.subr.mxu0 0.0
  %249 = vmatpush1.msra.mxu0 0.0
  %250 = vmatprep.subr.mxu0 0.0
  %251 = vmatpush1.msra.mxu0 0.0
  %252 = vmatprep.subr.mxu0 0.0
  %253 = vmatpush1.msra.mxu0 0.0
  %254 = vmatprep.subr.mxu0 0.0
  %255 = vmatpush1.msra.mxu0 0.0
  %256 = vmatprep.subr.mxu0 0.0
  %257 = vmatpush1.msra.mxu0 0.0
  %258 = vmatprep.subr.mxu0 0.0
  %259 = vmatpush1.msra.mxu0 0.0
  %260 = vmatprep.subr.mxu0 0.0
  %261 = vmatpush1.msra.mxu0 0.0
  %262 = vmatprep.subr.mxu0 0.0
  %263 = vmatpush1.msra.mxu0 0.0
  %264 = vmatprep.subr.mxu0 0.0
  %265 = vmatpush1.msra.mxu0 0.0
  %266 = vmatprep.subr.mxu0 0.0
  %267 = vmatpush1.msra.mxu0 0.0
  %268 = vmatprep.subr.mxu0 0.0
  %269 = vmatpush1.msra.mxu0 0.0
  %270 = vmatprep.mubr.f32.mxu0 0.0
  %271 = vmatmul.mubr.f32.gmra.mrb[0].mxu0 %v190
  %v272 = vpop.f32.mrb[0].mxu0
  %v273 = vadd.f32 0.0, %v272
  %v274 = vpop.f32.mrb[0].mxu0
  %275 = vmatprep.mubr.f32.mxu0 0.0
  %276 = vmatmul.mubr.f32.gmra.mrb[0].mxu0 %v191
  %v277 = vpop.f32.mrb[0].mxu0
  %v278 = vadd.f32 0.0, %v277
  %v279 = vpop.f32.mrb[0].mxu0
  %280 = vmatprep.mubr.f32.mxu0 0.0
  %281 = vmatmul.mubr.f32.gmra.mrb[0].mxu0 %v192
  %v282 = vpop.f32.mrb[0].mxu0
  %v283 = vadd.f32 0.0, %v282
  %v284 = vpop.f32.mrb[0].mxu0
  %285 = vmatprep.mubr.f32.mxu0 0.0
  %286 = vmatmul.mubr.f32.gmra.mrb[0].mxu0 %v193
  %v287 = vpop.f32.mrb[0].mxu0
  %v288 = vadd.f32 0.0, %v287
  %v289 = vpop.f32.mrb[0].mxu0
  %290 = vmatprep.mubr.f32.mxu0 0.0
  %291 = vmatmul.mubr.f32.gmra.mrb[0].mxu0 %v194
  %v292 = vpop.f32.mrb[0].mxu0
  %v293 = vadd.f32 0.0, %v292
  %v294 = vpop.f32.mrb[0].mxu0
  %295 = vmatprep.mubr.f32.mxu0 0.0
  %296 = vmatmul.mubr.f32.gmra.mrb[0].mxu0 %v195
  %v297 = vpop.f32.mrb[0].mxu0
  %v298 = vadd.f32 0.0, %v297
  %v299 = vpop.f32.mrb[0].mxu0
  %300 = vmatprep.mubr.f32.mxu0 0.0
  %301 = vmatmul.mubr.f32.gmra.mrb[0].mxu0 %v196
  %v302 = vpop.f32.mrb[0].mxu0
  %v303 = vadd.f32 0.0, %v302
  %v304 = vpop.f32.mrb[0].mxu0
  %305 = vmatprep.mubr.f32.mxu0 0.0
  %306 = vmatmul.mubr.f32.gmra.mrb[0].mxu0 %v197
  %v307 = vpop.f32.mrb[0].mxu0
  %v308 = vadd.f32 0.0, %v307
  %v309 = vpop.f32.mrb[0].mxu0
  %310 = vmatprep.mubr.f32.mxu0 0.0
  %311 = vmatmul.mubr.f32.gmra.mrb[0].mxu0 %v198
  %v312 = vpop.f32.mrb[0].mxu0
  %v313 = vadd.f32 0.0, %v312
  %v314 = vpop.f32.mrb[0].mxu0
  %315 = vmatprep.mubr.f32.mxu0 0.0
  %316 = vmatmul.mubr.f32.gmra.mrb[0].mxu0 %v199
  %v317 = vpop.f32.mrb[0].mxu0
  %v318 = vadd.f32 0.0, %v317
  %v319 = vpop.f32.mrb[0].mxu0
  %320 = vmatprep.mubr.f32.mxu0 0.0
  %321 = vmatmul.mubr.f32.gmra.mrb[0].mxu0 %v200
  %v322 = vpop.f32.mrb[0].mxu0
  %v323 = vadd.f32 0.0, %v322
  %v324 = vpop.f32.mrb[0].mxu0
  %325 = vmatprep.mubr.f32.mxu0 0.0
  %326 = vmatmul.mubr.f32.gmra.mrb[0].mxu0 %v201
  %v327 = vpop.f32.mrb[0].mxu0
  %v328 = vadd.f32 0.0, %v327
  %v329 = vpop.f32.mrb[0].mxu0
  %330 = vmatprep.mubr.f32.mxu0 0.0
  %331 = vmatmul.mubr.f32.gmra.mrb[0].mxu0 %v202
  %v332 = vpop.f32.mrb[0].mxu0
  %v333 = vadd.f32 0.0, %v332
  %v334 = vpop.f32.mrb[0].mxu0
  %335 = vmatprep.mubr.f32.mxu0 0.0
  %336 = vmatmul.mubr.f32.gmra.mrb[0].mxu0 %v203
  %v337 = vpop.f32.mrb[0].mxu0
  %v338 = vadd.f32 0.0, %v337
  %v339 = vpop.f32.mrb[0].mxu0
  %340 = vmatprep.mubr.f32.mxu0 0.0
  %341 = vmatmul.mubr.f32.gmra.mrb[0].mxu0 %v204
  %v342 = vpop.f32.mrb[0].mxu0
  %v343 = vadd.f32 0.0, %v342
  %v344 = vpop.f32.mrb[0].mxu0
  %345 = vmatprep.mubr.f32.mxu0 0.0
  %346 = vmatmul.mubr.f32.gmra.mrb[0].mxu0 %v205
  %v347 = vpop.f32.mrb[0].mxu0
  %v348 = vadd.f32 0.0, %v347
  %v349 = vpop.f32.mrb[0].mxu0
  %350 = vdwg.mxu0
  %v351 = vadd.f32 %v174, %v273
  %v352 = vadd.f32 %v175, %v278
  %v353 = vadd.f32 %v176, %v283
  %v354 = vadd.f32 %v177, %v288
  %v355 = vadd.f32 %v178, %v293
  %v356 = vadd.f32 %v179, %v298
  %v357 = vadd.f32 %v180, %v303
  %v358 = vadd.f32 %v181, %v308
  %v359 = vadd.f32 %v182, %v313
  %v360 = vadd.f32 %v183, %v318
  %v361 = vadd.f32 %v184, %v323
  %v362 = vadd.f32 %v185, %v328
  %v363 = vadd.f32 %v186, %v333
  %v364 = vadd.f32 %v187, %v338
  %v365 = vadd.f32 %v188, %v343
  %v366 = vadd.f32 %v189, %v348
  %367 = vst [vmem:[#allocation2] sm:$0xff] %v351
  %368 = vst [vmem:[#allocation2 + $0x8] sm:$0xff] %v352
  %369 = vst [vmem:[#allocation2 + $0x10] sm:$0xff] %v353
  %370 = vst [vmem:[#allocation2 + $0x18] sm:$0xff] %v354
  %371 = vst [vmem:[#allocation2 + $0x20] sm:$0xff] %v355
  %372 = vst [vmem:[#allocation2 + $0x28] sm:$0xff] %v356
  %373 = vst [vmem:[#allocation2 + $0x30] sm:$0xff] %v357
  %374 = vst [vmem:[#allocation2 + $0x38] sm:$0xff] %v358
  %375 = vst [vmem:[#allocation2 + $0x40] sm:$0xff] %v359
  %376 = vst [vmem:[#allocation2 + $0x48] sm:$0xff] %v360
  %377 = vst [vmem:[#allocation2 + $0x50] sm:$0xff] %v361
  %378 = vst [vmem:[#allocation2 + $0x58] sm:$0xff] %v362
  %379 = vst [vmem:[#allocation2 + $0x60] sm:$0xff] %v363
  %380 = vst [vmem:[#allocation2 + $0x68] sm:$0xff] %v364
  %381 = vst [vmem:[#allocation2 + $0x70] sm:$0xff] %v365
  %382 = vst [vmem:[#allocation2 + $0x78] sm:$0xff] %v366
  // Predicated region
  $region34: #{gcn_layer.3} parent=0 // pred_check
    %p383 = pneg %p26
  $region35: #{gcn_layer.3} parent=0 // pred_check_branch
    %385 = sbr.rel (%p383) target = $region37
  $region36: #{gcn_layer.3} parent=0 // pred_region
    %v386 = vld [vmem:[%s4] sm:$0xff]
    %v387 = vld [vmem:[%s4 + $0x8] sm:$0xff]
    %v388 = vld [vmem:[%s4 + $0x10] sm:$0xff]
    %v389 = vld [vmem:[%s4 + $0x18] sm:$0xff]
    %v390 = vld [vmem:[%s4 + $0x20] sm:$0xff]
    %v391 = vld [vmem:[%s4 + $0x28] sm:$0xff]
    %v392 = vld [vmem:[%s4 + $0x30] sm:$0xff]
    %v393 = vld [vmem:[%s4 + $0x38] sm:$0xff]
    %v394 = vld [vmem:[%s4 + $0x40] sm:$0xff]
    %v395 = vld [vmem:[%s4 + $0x48] sm:$0xff]
    %v396 = vld [vmem:[%s4 + $0x50] sm:$0xff]
    %v397 = vld [vmem:[%s4 + $0x58] sm:$0xff]
    %v398 = vld [vmem:[%s4 + $0x60] sm:$0xff]
    %v399 = vld [vmem:[%s4 + $0x68] sm:$0xff]
    %v400 = vld [vmem:[%s4 + $0x70] sm:$0xff]
    %v401 = vld [vmem:[%s4 + $0x78] sm:$0xff]
    %v402 = vld [vmem:[#allocation2] sm:$0xff]
    %v403 = vld [vmem:[#allocation2 + $0x8] sm:$0xff]
    %v404 = vld [vmem:[#allocation2 + $0x10] sm:$0xff]
    %v405 = vld [vmem:[#allocation2 + $0x18] sm:$0xff]
    %v406 = vld [vmem:[#allocation2 + $0x20] sm:$0xff]
    %v407 = vld [vmem:[#allocation2 + $0x28] sm:$0xff]
    %v408 = vld [vmem:[#allocation2 + $0x30] sm:$0xff]
    %v409 = vld [vmem:[#allocation2 + $0x38] sm:$0xff]
    %v410 = vld [vmem:[#allocation2 + $0x40] sm:$0xff]
    %v411 = vld [vmem:[#allocation2 + $0x48] sm:$0xff]
    %v412 = vld [vmem:[#allocation2 + $0x50] sm:$0xff]
    %v413 = vld [vmem:[#allocation2 + $0x58] sm:$0xff]
    %v414 = vld [vmem:[#allocation2 + $0x60] sm:$0xff]
    %v415 = vld [vmem:[#allocation2 + $0x68] sm:$0xff]
    %v416 = vld [vmem:[#allocation2 + $0x70] sm:$0xff]
    %v417 = vld [vmem:[#allocation2 + $0x78] sm:$0xff]
    %v418 = vld [vmem:[%s2] sm:$0xff]
    %v419 = vld [vmem:[%s2 + $0x8] sm:$0xff]
    %v420 = vld [vmem:[%s2 + $0x10] sm:$0xff]
    %v421 = vld [vmem:[%s2 + $0x18] sm:$0xff]
    %v422 = vld [vmem:[%s2 + $0x20] sm:$0xff]
    %v423 = vld [vmem:[%s2 + $0x28] sm:$0xff]
    %v424 = vld [vmem:[%s2 + $0x30] sm:$0xff]
    %v425 = vld [vmem:[%s2 + $0x38] sm:$0xff]
    %v426 = vld [vmem:[%s2 + $0x40] sm:$0xff]
    %v427 = vld [vmem:[%s2 + $0x48] sm:$0xff]
    %v428 = vld [vmem:[%s2 + $0x50] sm:$0xff]
    %v429 = vld [vmem:[%s2 + $0x58] sm:$0xff]
    %v430 = vld [vmem:[%s2 + $0x60] sm:$0xff]
    %v431 = vld [vmem:[%s2 + $0x68] sm:$0xff]
    %v432 = vld [vmem:[%s2 + $0x70] sm:$0xff]
    %v433 = vld [vmem:[%s2 + $0x78] sm:$0xff]
    %435 = vset.pattern.permute.xlu0 0
    %436 = vperm.xlu0 %435, %v386
    %v437 = vpop.permute.xlu0 %436
    %440 = vset.pattern.permute.xlu0 0
    %441 = vperm.xlu0 %440, %v387
    %v442 = vpop.permute.xlu0 %441
    %445 = vset.pattern.permute.xlu0 0
    %446 = vperm.xlu0 %445, %v388
    %v447 = vpop.permute.xlu0 %446
    %450 = vset.pattern.permute.xlu0 0
    %451 = vperm.xlu0 %450, %v389
    %v452 = vpop.permute.xlu0 %451
    %455 = vset.pattern.permute.xlu0 0
    %456 = vperm.xlu0 %455, %v390
    %v457 = vpop.permute.xlu0 %456
    %460 = vset.pattern.permute.xlu0 0
    %461 = vperm.xlu0 %460, %v391
    %v462 = vpop.permute.xlu0 %461
    %465 = vset.pattern.permute.xlu0 0
    %466 = vperm.xlu0 %465, %v392
    %v467 = vpop.permute.xlu0 %466
    %470 = vset.pattern.permute.xlu0 0
    %471 = vperm.xlu0 %470, %v393
    %v472 = vpop.permute.xlu0 %471
    %475 = vset.pattern.permute.xlu0 0
    %476 = vperm.xlu0 %475, %v394
    %v477 = vpop.permute.xlu0 %476
    %480 = vset.pattern.permute.xlu0 0
    %481 = vperm.xlu0 %480, %v395
    %v482 = vpop.permute.xlu0 %481
    %485 = vset.pattern.permute.xlu0 0
    %486 = vperm.xlu0 %485, %v396
    %v487 = vpop.permute.xlu0 %486
    %490 = vset.pattern.permute.xlu0 0
    %491 = vperm.xlu0 %490, %v397
    %v492 = vpop.permute.xlu0 %491
    %495 = vset.pattern.permute.xlu0 0
    %496 = vperm.xlu0 %495, %v398
    %v497 = vpop.permute.xlu0 %496
    %500 = vset.pattern.permute.xlu0 0
    %501 = vperm.xlu0 %500, %v399
    %v502 = vpop.permute.xlu0 %501
    %505 = vset.pattern.permute.xlu0 0
    %506 = vperm.xlu0 %505, %v400
    %v507 = vpop.permute.xlu0 %506
    %510 = vset.pattern.permute.xlu0 0
    %511 = vperm.xlu0 %510, %v401
    %v512 = vpop.permute.xlu0 %511
    %v514 = vmul.f32 %v437, %v418
    %v515 = vmul.f32 %v442, %v419
    %v516 = vmul.f32 %v447, %v420
    %v517 = vmul.f32 %v452, %v421
    %v518 = vmul.f32 %v457, %v422
    %v519 = vmul.f32 %v462, %v423
    %v520 = vmul.f32 %v467, %v424
    %v521 = vmul.f32 %v472, %v425
    %v522 = vmul.f32 %v477, %v426
    %v523 = vmul.f32 %v482, %v427
    %v524 = vmul.f32 %v487, %v428
    %v525 = vmul.f32 %v492, %v429
    %v526 = vmul.f32 %v497, %v430
    %v527 = vmul.f32 %v502, %v431
    %v528 = vmul.f32 %v507, %v432
    %v529 = vmul.f32 %v512, %v433
    %v530 = vadd.f32 %v402, %v514
    %v531 = vadd.f32 %v403, %v515
    %v532 = vadd.f32 %v404, %v516
    %v533 = vadd.f32 %v405, %v517
    %v534 = vadd.f32 %v406, %v518
    %v535 = vadd.f32 %v407, %v519
    %v536 = vadd.f32 %v408, %v520
    %v537 = vadd.f32 %v409, %v521
    %v538 = vadd.f32 %v410, %v522
    %v539 = vadd.f32 %v411, %v523
    %v540 = vadd.f32 %v412, %v524
    %v541 = vadd.f32 %v413, %v525
    %v542 = vadd.f32 %v414, %v526
    %v543 = vadd.f32 %v415, %v527
    %v544 = vadd.f32 %v416, %v528
    %v545 = vadd.f32 %v417, %v529
    %v546 = vmul.f32 %v437, %v530
    %v547 = vmul.f32 %v442, %v531
    %v548 = vmul.f32 %v447, %v532
    %v549 = vmul.f32 %v452, %v533
    %v550 = vmul.f32 %v457, %v534
    %v551 = vmul.f32 %v462, %v535
    %v552 = vmul.f32 %v467, %v536
    %v553 = vmul.f32 %v472, %v537
    %v554 = vmul.f32 %v477, %v538
    %v555 = vmul.f32 %v482, %v539
    %v556 = vmul.f32 %v487, %v540
    %v557 = vmul.f32 %v492, %v541
    %v558 = vmul.f32 %v497, %v542
    %v559 = vmul.f32 %v502, %v543
    %v560 = vmul.f32 %v507, %v544
    %v561 = vmul.f32 %v512, %v545
    %v562 = vld [vmem:[%s5] sm:$0xff]
    %v563 = vld [vmem:[%s5 + $0x8] sm:$0xff]
    %v564 = vld [vmem:[%s5 + $0x10] sm:$0xff]
    %v565 = vld [vmem:[%s5 + $0x18] sm:$0xff]
    %v566 = vld [vmem:[%s5 + $0x20] sm:$0xff]
    %v567 = vld [vmem:[%s5 + $0x28] sm:$0xff]
    %v568 = vld [vmem:[%s5 + $0x30] sm:$0xff]
    %v569 = vld [vmem:[%s5 + $0x38] sm:$0xff]
    %v570 = vld [vmem:[%s5 + $0x40] sm:$0xff]
    %v571 = vld [vmem:[%s5 + $0x48] sm:$0xff]
    %v572 = vld [vmem:[%s5 + $0x50] sm:$0xff]
    %v573 = vld [vmem:[%s5 + $0x58] sm:$0xff]
    %v574 = vld [vmem:[%s5 + $0x60] sm:$0xff]
    %v575 = vld [vmem:[%s5 + $0x68] sm:$0xff]
    %v576 = vld [vmem:[%s5 + $0x70] sm:$0xff]
    %v577 = vld [vmem:[%s5 + $0x78] sm:$0xff]
    %v578 = vld [vmem:[%s6] sm:$0x1]
    %v580 = vlaneseq
    %v581 = vshrl.u32 %v580, 7
    %v582 = vsub.s32 0, %v581
    %v583 = vrot.slane %v578, %v582
    %585 = vmatprep.subr.mxu0 0.0
    %586 = vmatpush1.msra.mxu0 %v562
    %587 = vmatprep.subr.mxu0 0.0
    %588 = vmatpush1.msra.mxu0 %v563
    %589 = vmatprep.subr.mxu0 0.0
    %590 = vmatpush1.msra.mxu0 %v564
    %591 = vmatprep.subr.mxu0 0.0
    %592 = vmatpush1.msra.mxu0 %v565
    %593 = vmatprep.subr.mxu0 0.0
    %594 = vmatpush1.msra.mxu0 %v566
    %595 = vmatprep.subr.mxu0 0.0
    %596 = vmatpush1.msra.mxu0 %v567
    %597 = vmatprep.subr.mxu0 0.0
    %598 = vmatpush1.msra.mxu0 %v568
    %599 = vmatprep.subr.mxu0 0.0
    %600 = vmatpush1.msra.mxu0 %v569
    %601 = vmatprep.subr.mxu0 0.0
    %602 = vmatpush1.msra.mxu0 %v570
    %603 = vmatprep.subr.mxu0 0.0
    %604 = vmatpush1.msra.mxu0 %v571
    %605 = vmatprep.subr.mxu0 0.0
    %606 = vmatpush1.msra.mxu0 %v572
    %607 = vmatprep.subr.mxu0 0.0
    %608 = vmatpush1.msra.mxu0 %v573
    %609 = vmatprep.subr.mxu0 0.0
    %610 = vmatpush1.msra.mxu0 %v574
    %611 = vmatprep.subr.mxu0 0.0
    %612 = vmatpush1.msra.mxu0 %v575
    %613 = vmatprep.subr.mxu0 0.0
    %614 = vmatpush1.msra.mxu0 %v576
    %615 = vmatprep.subr.mxu0 0.0
    %616 = vmatpush1.msra.mxu0 %v577
    %617 = vmatprep.subr.mxu0 0.0
    %618 = vmatpush1.msra.mxu0 0.0
    %619 = vmatprep.subr.mxu0 0.0
    %620 = vmatpush1.msra.mxu0 0.0
    %621 = vmatprep.subr.mxu0 0.0
    %622 = vmatpush1.msra.mxu0 0.0
    %623 = vmatprep.subr.mxu0 0.0
    %624 = vmatpush1.msra.mxu0 0.0
    %625 = vmatprep.subr.mxu0 0.0
    %626 = vmatpush1.msra.mxu0 0.0
    %627 = vmatprep.subr.mxu0 0.0
    %628 = vmatpush1.msra.mxu0 0.0
    %629 = vmatprep.subr.mxu0 0.0
    %630 = vmatpush1.msra.mxu0 0.0
    %631 = vmatprep.subr.mxu0 0.0
    %632 = vmatpush1.msra.mxu0 0.0
    %633 = vmatprep.subr.mxu0 0.0
    %634 = vmatpush1.msra.mxu0 0.0
    %635 = vmatprep.subr.mxu0 0.0
    %636 = vmatpush1.msra.mxu0 0.0
    %637 = vmatprep.subr.mxu0 0.0
    %638 = vmatpush1.msra.mxu0 0.0
    %639 = vmatprep.subr.mxu0 0.0
    %640 = vmatpush1.msra.mxu0 0.0
    %641 = vmatprep.subr.mxu0 0.0
    %642 = vmatpush1.msra.mxu0 0.0
    %643 = vmatprep.subr.mxu0 0.0
    %644 = vmatpush1.msra.mxu0 0.0
    %645 = vmatprep.subr.mxu0 0.0
    %646 = vmatpush1.msra.mxu0 0.0
    %647 = vmatprep.subr.mxu0 0.0
    %648 = vmatpush1.msra.mxu0 0.0
    %649 = vmatprep.mubr.f32.mxu0 0.0
    %650 = vmatmul.mubr.f32.gmra.mrb[0].mxu0 %v546
    %v651 = vpop.f32.mrb[0].mxu0
    %v652 = vadd.f32 %v583, %v651
    %v653 = vpop.f32.mrb[0].mxu0
    %654 = vmatprep.mubr.f32.mxu0 0.0
    %655 = vmatmul.mubr.f32.gmra.mrb[0].mxu0 %v547
    %v656 = vpop.f32.mrb[0].mxu0
    %v657 = vadd.f32 %v583, %v656
    %v658 = vpop.f32.mrb[0].mxu0
    %659 = vmatprep.mubr.f32.mxu0 0.0
    %660 = vmatmul.mubr.f32.gmra.mrb[0].mxu0 %v548
    %v661 = vpop.f32.mrb[0].mxu0
    %v662 = vadd.f32 %v583, %v661
    %v663 = vpop.f32.mrb[0].mxu0
    %664 = vmatprep.mubr.f32.mxu0 0.0
    %665 = vmatmul.mubr.f32.gmra.mrb[0].mxu0 %v549
    %v666 = vpop.f32.mrb[0].mxu0
    %v667 = vadd.f32 %v583, %v666
    %v668 = vpop.f32.mrb[0].mxu0
    %669 = vmatprep.mubr.f32.mxu0 0.0
    %670 = vmatmul.mubr.f32.gmra.mrb[0].mxu0 %v550
    %v671 = vpop.f32.mrb[0].mxu0
    %v672 = vadd.f32 %v583, %v671
    %v673 = vpop.f32.mrb[0].mxu0
    %674 = vmatprep.mubr.f32.mxu0 0.0
    %675 = vmatmul.mubr.f32.gmra.mrb[0].mxu0 %v551
    %v676 = vpop.f32.mrb[0].mxu0
    %v677 = vadd.f32 %v583, %v676
    %v678 = vpop.f32.mrb[0].mxu0
    %679 = vmatprep.mubr.f32.mxu0 0.0
    %680 = vmatmul.mubr.f32.gmra.mrb[0].mxu0 %v552
    %v681 = vpop.f32.mrb[0].mxu0
    %v682 = vadd.f32 %v583, %v681
    %v683 = vpop.f32.mrb[0].mxu0
    %684 = vmatprep.mubr.f32.mxu0 0.0
    %685 = vmatmul.mubr.f32.gmra.mrb[0].mxu0 %v553
    %v686 = vpop.f32.mrb[0].mxu0
    %v687 = vadd.f32 %v583, %v686
    %v688 = vpop.f32.mrb[0].mxu0
    %689 = vmatprep.mubr.f32.mxu0 0.0
    %690 = vmatmul.mubr.f32.gmra.mrb[0].mxu0 %v554
    %v691 = vpop.f32.mrb[0].mxu0
    %v692 = vadd.f32 %v583, %v691
    %v693 = vpop.f32.mrb[0].mxu0
    %694 = vmatprep.mubr.f32.mxu0 0.0
    %695 = vmatmul.mubr.f32.gmra.mrb[0].mxu0 %v555
    %v696 = vpop.f32.mrb[0].mxu0
    %v697 = vadd.f32 %v583, %v696
    %v698 = vpop.f32.mrb[0].mxu0
    %699 = vmatprep.mubr.f32.mxu0 0.0
    %700 = vmatmul.mubr.f32.gmra.mrb[0].mxu0 %v556
    %v701 = vpop.f32.mrb[0].mxu0
    %v702 = vadd.f32 %v583, %v701
    %v703 = vpop.f32.mrb[0].mxu0
    %704 = vmatprep.mubr.f32.mxu0 0.0
    %705 = vmatmul.mubr.f32.gmra.mrb[0].mxu0 %v557
    %v706 = vpop.f32.mrb[0].mxu0
    %v707 = vadd.f32 %v583, %v706
    %v708 = vpop.f32.mrb[0].mxu0
    %709 = vmatprep.mubr.f32.mxu0 0.0
    %710 = vmatmul.mubr.f32.gmra.mrb[0].mxu0 %v558
    %v711 = vpop.f32.mrb[0].mxu0
    %v712 = vadd.f32 %v583, %v711
    %v713 = vpop.f32.mrb[0].mxu0
    %714 = vmatprep.mubr.f32.mxu0 0.0
    %715 = vmatmul.mubr.f32.gmra.mrb[0].mxu0 %v559
    %v716 = vpop.f32.mrb[0].mxu0
    %v717 = vadd.f32 %v583, %v716
    %v718 = vpop.f32.mrb[0].mxu0
    %719 = vmatprep.mubr.f32.mxu0 0.0
    %720 = vmatmul.mubr.f32.gmra.mrb[0].mxu0 %v560
    %v721 = vpop.f32.mrb[0].mxu0
    %v722 = vadd.f32 %v583, %v721
    %v723 = vpop.f32.mrb[0].mxu0
    %724 = vmatprep.mubr.f32.mxu0 0.0
    %725 = vmatmul.mubr.f32.gmra.mrb[0].mxu0 %v561
    %v726 = vpop.f32.mrb[0].mxu0
    %v727 = vadd.f32 %v583, %v726
    %v728 = vpop.f32.mrb[0].mxu0
    %729 = vdwg.mxu0
    %730 = vst [vmem:[%s7] sm:$0xff] %v652
    %731 = vst [vmem:[%s7 + $0x8] sm:$0xff] %v657
    %732 = vst [vmem:[%s7 + $0x10] sm:$0xff] %v662
    %733 = vst [vmem:[%s7 + $0x18] sm:$0xff] %v667
    %734 = vst [vmem:[%s7 + $0x20] sm:$0xff] %v672
    %735 = vst [vmem:[%s7 + $0x28] sm:$0xff] %v677
    %736 = vst [vmem:[%s7 + $0x30] sm:$0xff] %v682
    %737 = vst [vmem:[%s7 + $0x38] sm:$0xff] %v687
    %738 = vst [vmem:[%s7 + $0x40] sm:$0xff] %v692
    %739 = vst [vmem:[%s7 + $0x48] sm:$0xff] %v697
    %740 = vst [vmem:[%s7 + $0x50] sm:$0xff] %v702
    %741 = vst [vmem:[%s7 + $0x58] sm:$0xff] %v707
    %742 = vst [vmem:[%s7 + $0x60] sm:$0xff] %v712
    %743 = vst [vmem:[%s7 + $0x68] sm:$0xff] %v717
    %744 = vst [vmem:[%s7 + $0x70] sm:$0xff] %v722
    %745 = vst [vmem:[%s7 + $0x78] sm:$0xff] %v727
  $region37: #{gcn_layer.3} parent=0 // pred_fallthru
    _
  // Predicated region
  $region38: #{gcn_layer.3} parent=0 // pred_check
    _
  $region39: #{gcn_layer.3} parent=0 // pred_check_branch
    %747 = sbr.rel (0) target = $region41
  $region40: #{gcn_layer.3} parent=0 // pred_region
    _
  $region41: #{gcn_layer.3} parent=0 // pred_fallthru
    _
  // Predicated region
  $region42: #{gcn_layer.3} parent=0 // pred_check
    _
  $region43: #{gcn_layer.3} parent=0 // pred_check_branch
    %749 = sbr.rel (0) target = $region45
  $region44: #{gcn_layer.3} parent=0 // pred_region
    _
  $region45: #{gcn_layer.3} parent=0 // pred_fallthru
    _

</llo_original>
